<compile_context>
chip_gen: v7x
topology: tpu7x:2x2x1
jax: 0.10.0
libtpu: 0.0.40
codegen_flags: <defaults>
</compile_context>

<pallas_src>
import math

import jax
import jax.numpy as jnp
from jax.experimental import pallas as pl
from jax.experimental.pallas import tpu as pltpu


# ---------------------------------------------------------------------------
# Kernels
# ---------------------------------------------------------------------------

def _pe_add_flat_kernel(B, D):
    """Kernel for x viewed as (ts, B*D) with PE as (ts, D); requires D % 128 == 0."""

    def kernel(x_ref, pe_ref, o_ref):
        pe = pe_ref[...]                       # (ts, D), loaded once
        for b in range(B):                     # static unroll; 128-aligned lane slices
            sl = pl.ds(b * D, D)
            o_ref[:, sl] = x_ref[:, sl] + pe

    return kernel


def _pe_add_bcast_kernel(x_ref, pe_ref, o_ref):
    """x_ref/o_ref: (ts, B, D); pe_ref: (ts, 1, D). Broadcast add over batch."""
    o_ref[...] = x_ref[...] + pe_ref[...]


# ---------------------------------------------------------------------------
# Table construction (done once, outside the per-call forward path)
# ---------------------------------------------------------------------------

def make_positional_encoding_table(d_model, max_len=700, dtype=jnp.float32):
    """Deterministic sinusoidal table matching the PyTorch __init__."""
    position = jnp.arange(0, max_len, dtype=jnp.float32)[:, None]            # (max_len, 1)
    div_term = jnp.exp(
        jnp.arange(0, d_model, 2, dtype=jnp.float32) * (-math.log(10000.0) / d_model)
    )                                                                         # (ceil(d/2),)
    angles = position * div_term                                              # (max_len, ceil(d/2))
    pe = jnp.zeros((max_len, d_model), dtype=jnp.float32)
    pe = pe.at[:, 0::2].set(jnp.sin(angles))
    pe = pe.at[:, 1::2].set(jnp.cos(angles[:, : d_model // 2]))
    return pe.astype(dtype)                                                   # (max_len, d_model)


# ---------------------------------------------------------------------------
# Tiling heuristics
# ---------------------------------------------------------------------------

def _vmem_budget():
    """(target_block_bytes, vmem_limit_bytes), chosen per TPU generation."""
    kind = ""
    try:
        kind = jax.devices()[0].device_kind.lower()
    except Exception:
        pass
    if ("v4" in kind) or ("v5" in kind) or ("v6" in kind):
        # 128 MiB physical VMEM: larger blocks, raise the scoped default.
        return 8 << 20, 64 * 1024 * 1024
    # v7x (64 MiB physical VMEM per core) or unknown: stay conservative.
    return 4 << 20, 32 * 1024 * 1024


def _choose_seq_tile(S, row_bytes, target_block_bytes,
                     min_block_bytes=1 << 20, min_steps=8):
    """Rows per block: ~target_block_bytes of x per block (multiple of 8),
    capped so the grid keeps >= min_steps steps when blocks can stay >=
    min_block_bytes (>= 3-4 steps per v7x TensorCore for pipeline overlap)."""
    ts = max(8, (target_block_bytes // max(row_bytes, 1)) // 8 * 8)
    cap = pl.cdiv(pl.cdiv(S, min_steps), 8) * 8
    if cap * row_bytes >= min_block_bytes:
        ts = min(ts, cap)
    if S <= ts:
        ts = S  # single full-extent block (legal even if S % 8 != 0)
    return ts


# ---------------------------------------------------------------------------
# Forward
# ---------------------------------------------------------------------------

def positional_encoding_forward(x, pe_table, *, seq_tile=None):
    """x: (S, B, D); pe_table: (max_len, D), already in the model dtype.
    Returns x + pe_table[:S] broadcast over the batch axis."""
    S, B, D = x.shape
    max_len = pe_table.shape[0]
    if S > max_len:
        raise ValueError(f"sequence length {S} exceeds max_len {max_len}")

    pe = pe_table[:S]                         # (S, D); S*D bytes, negligible
    if pe.dtype != x.dtype:
        pe = pe.astype(x.dtype)

    itemsize = jnp.dtype(x.dtype).itemsize
    target_block_bytes, vmem_limit = _vmem_budget()
    compiler_params = pltpu.CompilerParams(
        dimension_semantics=("parallel",),
        vmem_limit_bytes=vmem_limit,
    )

    if D % 128 == 0:
        # Lane-dense flat path: x -> (S, B*D); in-kernel batch broadcast of PE.
        W = B * D
        row_bytes = W * itemsize
        ts = seq_tile if seq_tile is not None else _choose_seq_tile(
            S, row_bytes, target_block_bytes)
        grid = (pl.cdiv(S, ts),)
        x2 = x.reshape(S, W)
        out2 = pl.pallas_call(
            _pe_add_flat_kernel(B, D),
            out_shape=jax.ShapeDtypeStruct((S, W), x.dtype),
            grid=grid,
            in_specs=[
                pl.BlockSpec((ts, W), lambda i: (i, 0)),
                pl.BlockSpec((ts, D), lambda i: (i, 0)),
            ],
            out_specs=pl.BlockSpec((ts, W), lambda i: (i, 0)),
            input_output_aliases={0: 0},
            compiler_params=compiler_params,
        )(x2, pe)
        return out2.reshape(S, B, D)

    # Generic path: 3-D blocks, PE broadcast over the batch axis in-kernel.
    # Byte budget uses padded (sublane/lane) extents so small B/D don't OOM.
    padded_row_bytes = (pl.cdiv(B, 8) * 8) * (pl.cdiv(D, 128) * 128) * itemsize
    ts = seq_tile if seq_tile is not None else _choose_seq_tile(
        S, padded_row_bytes, target_block_bytes)
    grid = (pl.cdiv(S, ts),)
    pe3 = pe[:, None, :]                                  # (S, 1, D)
    out = pl.pallas_call(
        _pe_add_bcast_kernel,
        out_shape=jax.ShapeDtypeStruct((S, B, D), x.dtype),
        grid=grid,
        in_specs=[
            pl.BlockSpec((ts, B, D), lambda i: (i, 0, 0)),
            pl.BlockSpec((ts, 1, D), lambda i: (i, 0, 0)),
        ],
        out_specs=pl.BlockSpec((ts, B, D), lambda i: (i, 0, 0)),
        input_output_aliases={0: 0},
        compiler_params=compiler_params,
    )(x, pe3)
    return out


# ---------------------------------------------------------------------------
# Self-test
# ---------------------------------------------------------------------------

if __name__ == "__main__":
    max_len = 700
    key = jax.random.PRNGKey(0)

    # Case 1: generic 3-D broadcast path (D % 128 != 0), single block.
    S, B, D = 8, 2, 32
    x = jax.random.normal(key, (S, B, D), dtype=jnp.float32)
    pe_table = make_positional_encoding_table(D, max_len=max_len)
    ref = x + pe_table[:S][:, None, :]
    out = jax.block_until_ready(positional_encoding_forward(x, pe_table))
    assert out.shape == (S, B, D)
    assert jnp.allclose(out, ref, atol=1e-6), "mismatch vs reference (broadcast path)"

    # Case 2: lane-dense flat path (D % 128 == 0), forced seq_tile=8 so the
    # cdiv grid has 3 steps including a partial final block.
    S2, B2, D2 = 20, 2, 128
    x2 = jax.random.normal(jax.random.PRNGKey(0), (S2, B2, D2), dtype=jnp.float32)
    pe_table2 = make_positional_encoding_table(D2, max_len=max_len)
    ref2 = x2 + pe_table2[:S2][:, None, :]
    out2 = jax.block_until_ready(
        positional_encoding_forward(x2, pe_table2, seq_tile=8))
    assert jnp.allclose(out2, ref2, atol=1e-6), "mismatch vs reference (flat path)"

    # Case 3: broadcast path with a partial final block.
    S3, B3, D3 = 20, 2, 32
    x3 = jax.random.normal(jax.random.PRNGKey(0), (S3, B3, D3), dtype=jnp.float32)
    pe_table3 = make_positional_encoding_table(D3, max_len=max_len)
    ref3 = x3 + pe_table3[:S3][:, None, :]
    out3 = jax.block_until_ready(
        positional_encoding_forward(x3, pe_table3, seq_tile=8))
    assert jnp.allclose(out3, ref3, atol=1e-6), "mismatch vs reference (partial block)"

    print("KERNEL_OK")
</pallas_src>

<mosaic_0001>
module attributes {stable_mosaic.version = 11 : i64} {
  func.func @_pe_add_bcast_kernel(%arg0: i32, %arg1: memref<8x2x32xf32, #tpu.memory_space<vmem>>, %arg2: memref<8x1x32xf32, #tpu.memory_space<vmem>>, %arg3: memref<8x2x32xf32, #tpu.memory_space<vmem>>) attributes {dimension_semantics = [#tpu.dimension_semantics<parallel>], iteration_bounds = array<i64: 1>, scalar_prefetch = 0 : i64, scratch_operands = 0 : i64, tpu.core_type = #tpu.core_type<tc>, window_params = [{transform_indices = @transform_0, window_bounds = array<i64: 8, 2, 32>}, {transform_indices = @transform_1, window_bounds = array<i64: 8, 1, 32>}, {transform_indices = @transform_2, window_bounds = array<i64: 8, 2, 32>}]} {
    %c0 = arith.constant 0 : index
    %c0_0 = arith.constant 0 : index
    %c0_1 = arith.constant 0 : index
    %0 = vector.load %arg1[%c0, %c0_0, %c0_1] : memref<8x2x32xf32, #tpu.memory_space<vmem>>, vector<8x2x32xf32>
    %c0_2 = arith.constant 0 : index
    %c0_3 = arith.constant 0 : index
    %c0_4 = arith.constant 0 : index
    %1 = vector.load %arg2[%c0_2, %c0_3, %c0_4] : memref<8x1x32xf32, #tpu.memory_space<vmem>>, vector<8x1x32xf32>
    %2 = vector.broadcast %1 : vector<8x1x32xf32> to vector<8x2x32xf32>
    %3 = arith.addf %0, %2 : vector<8x2x32xf32>
    %c0_5 = arith.constant 0 : index
    %c0_6 = arith.constant 0 : index
    %c0_7 = arith.constant 0 : index
    %4 = vector.load %arg3[%c0_5, %c0_6, %c0_7] : memref<8x2x32xf32, #tpu.memory_space<vmem>>, vector<8x2x32xf32>
    tpu.vector_store %arg3[%c0_5, %c0_6, %c0_7], %3 {strides = array<i32>} : memref<8x2x32xf32, #tpu.memory_space<vmem>>, vector<8x2x32xf32>,
    return
  }
  func.func @transform_0(%arg0: i32) -> (i32, i32, i32) {
    %c0_i32 = arith.constant 0 : i32
    %c0_i32_0 = arith.constant 0 : i32
    %c0_i32_1 = arith.constant 0 : i32
    return %arg0, %c0_i32, %c0_i32_0 : i32, i32, i32
  }
  func.func @transform_1(%arg0: i32) -> (i32, i32, i32) {
    %c0_i32 = arith.constant 0 : i32
    %c0_i32_0 = arith.constant 0 : i32
    %c0_i32_1 = arith.constant 0 : i32
    return %arg0, %c0_i32, %c0_i32_0 : i32, i32, i32
  }
  func.func @transform_2(%arg0: i32) -> (i32, i32, i32) {
    %c0_i32 = arith.constant 0 : i32
    %c0_i32_0 = arith.constant 0 : i32
    %c0_i32_1 = arith.constant 0 : i32
    return %arg0, %c0_i32, %c0_i32_0 : i32, i32, i32
  }
}

</mosaic_0001>

<llo_original>
// kernel: tpu_custom_call.1
$region0: #{tpu_custom_call.1}
  #allocation0 [shape = 'u32[]', space=smem, size = 0x4, offset = 0x4, fixed_abs, tag = 'smem constant byte address 0x4 - core index']
  #allocation1 [shape = 'u32[144,128]{1,0:T(1,128)}', space=vmem, size = 0x12000, scoped, tag = 'internal scratch']
  %s0 = inlined_call_operand.hbm [shape: f32[8,2,32], index: 0, kind: input, shape index: {}, may-alias: {0,2}]
  %s1 = inlined_call_operand.vmem [shape: f32[8,1,32], index: 1, kind: input, shape index: {}]
  %s2 = inlined_call_operand.hbm [shape: f32[8,2,32], index: 2, kind: output, shape index: {}, may-alias: {0,2}]
  %s3 = sld [smem:[#allocation0]]
  $region22: #{tpu_custom_call.1} parent=0
    _
  %s5 = ssub.s32 1, %s3
  %s6 = scalar_select 0, %s5, %s3
  $region1: #{tpu_custom_call.1} parent=0
    #allocation2 [shape = 'u8[8192]{0}', space=vmem, size = 0x2000, scoped, tag = 'input window, operand 0, single buffered']
    #allocation3 [shape = 's32[1]{0}', space=sflag, size = 0x4, scoped, tag = 'scoped memory for tpu_custom_call.1']
    #allocation4 [shape = 's32[1]{0}', space=sflag, size = 0x4, scoped, tag = 'scoped memory for tpu_custom_call.1']
    #allocation5 [shape = 'u8[8192]{0}', space=vmem, size = 0x2000, scoped, tag = 'output window, operand 0, single buffered']
    %7 = vsyncpa [#allocation3], 0
    %8 = vsyncpa [#allocation4], 0
    // Predicated region
    $region2: #{tpu_custom_call.1} parent=1 // pred_check
      _
    $region3: #{tpu_custom_call.1} parent=1 // pred_check_branch
      %10 = sbr.rel (0) target = $region5
    $region4: #{tpu_custom_call.1} parent=1 // pred_region
      %s12 = ssub.s32 256, 256
      %13 = vsyncadd [#allocation3], %s12
      %s14 = sshll.u32 [#allocation2], 4
      %s15 = int_to_ptr.vmem [resolvable:$true] %s14
      %20 = dma.hbm_to_vmem [thread:$0]  %s0, 256, %s15, [#allocation3], 32, 32, 2
    $region5: #{tpu_custom_call.1} parent=1 // pred_fallthru
      _
    // Predicated region
    $region6: #{tpu_custom_call.1} parent=1 // pred_check
      _
    $region7: #{tpu_custom_call.1} parent=1 // pred_check_branch
      %22 = sbr.rel (0) target = $region9
    $region8: #{tpu_custom_call.1} parent=1 // pred_region
      _
    $region9: #{tpu_custom_call.1} parent=1 // pred_fallthru
      _
    // Predicated region
    $region10: #{tpu_custom_call.1} parent=1 // pred_check
      _
    $region11: #{tpu_custom_call.1} parent=1 // pred_check_branch
      %24 = sbr.rel (0) target = $region13
    $region12: #{tpu_custom_call.1} parent=1 // pred_region
      %25 = dma.done [#allocation3], 256
    $region13: #{tpu_custom_call.1} parent=1 // pred_fallthru
      _
    %v26 = vld [vmem:[#allocation2] sm:$0x3]
    %v27 = vld [vmem:[#allocation2 + $0x2] sm:$0x3]
    %v28 = vld [vmem:[#allocation2 + $0x4] sm:$0x3]
    %v29 = vld [vmem:[#allocation2 + $0x6] sm:$0x3]
    %v30 = vld [vmem:[#allocation2 + $0x8] sm:$0x3]
    %v31 = vld [vmem:[#allocation2 + $0xa] sm:$0x3]
    %v32 = vld [vmem:[#allocation2 + $0xc] sm:$0x3]
    %v33 = vld [vmem:[#allocation2 + $0xe] sm:$0x3]
    %v34 = vld [vmem:[%s1] sm:$0x1]
    %v35 = vld [vmem:[%s1 + $0x1] sm:$0x1]
    %v36 = vld [vmem:[%s1 + $0x2] sm:$0x1]
    %v37 = vld [vmem:[%s1 + $0x3] sm:$0x1]
    %v38 = vld [vmem:[%s1 + $0x4] sm:$0x1]
    %v39 = vld [vmem:[%s1 + $0x5] sm:$0x1]
    %v40 = vld [vmem:[%s1 + $0x6] sm:$0x1]
    %v41 = vld [vmem:[%s1 + $0x7] sm:$0x1]
    %v50 = vlaneseq
    %v51 = vshrl.u32 %v50, 7
    %v52 = vsub.s32 0, %v51
    %v53 = vrot.slane %v34, %v52
    %v54 = vlaneseq
    %v55 = vshrl.u32 %v54, 7
    %v56 = vsub.s32 0, %v55
    %v57 = vrot.slane %v35, %v56
    %v58 = vlaneseq
    %v59 = vshrl.u32 %v58, 7
    %v60 = vsub.s32 0, %v59
    %v61 = vrot.slane %v36, %v60
    %v62 = vlaneseq
    %v63 = vshrl.u32 %v62, 7
    %v64 = vsub.s32 0, %v63
    %v65 = vrot.slane %v37, %v64
    %v66 = vlaneseq
    %v67 = vshrl.u32 %v66, 7
    %v68 = vsub.s32 0, %v67
    %v69 = vrot.slane %v38, %v68
    %v70 = vlaneseq
    %v71 = vshrl.u32 %v70, 7
    %v72 = vsub.s32 0, %v71
    %v73 = vrot.slane %v39, %v72
    %v74 = vlaneseq
    %v75 = vshrl.u32 %v74, 7
    %v76 = vsub.s32 0, %v75
    %v77 = vrot.slane %v40, %v76
    %v78 = vlaneseq
    %v79 = vshrl.u32 %v78, 7
    %v80 = vsub.s32 0, %v79
    %v81 = vrot.slane %v41, %v80
    %v90 = vadd.f32 %v26, %v53
    %v91 = vadd.f32 %v27, %v57
    %v92 = vadd.f32 %v28, %v61
    %v93 = vadd.f32 %v29, %v65
    %v94 = vadd.f32 %v30, %v69
    %v95 = vadd.f32 %v31, %v73
    %v96 = vadd.f32 %v32, %v77
    %v97 = vadd.f32 %v33, %v81
    %vm98 = vcmask 254976
    %99 = vst.msk [vmem:[#allocation5] sm:$0x3] %vm98, %v90
    %100 = vst.msk [vmem:[#allocation5 + $0x2] sm:$0x3] %vm98, %v91
    %101 = vst.msk [vmem:[#allocation5 + $0x4] sm:$0x3] %vm98, %v92
    %102 = vst.msk [vmem:[#allocation5 + $0x6] sm:$0x3] %vm98, %v93
    %103 = vst.msk [vmem:[#allocation5 + $0x8] sm:$0x3] %vm98, %v94
    %104 = vst.msk [vmem:[#allocation5 + $0xa] sm:$0x3] %vm98, %v95
    %105 = vst.msk [vmem:[#allocation5 + $0xc] sm:$0x3] %vm98, %v96
    %106 = vst.msk [vmem:[#allocation5 + $0xe] sm:$0x3] %vm98, %v97
    // Predicated region
    $region14: #{tpu_custom_call.1} parent=1 // pred_check
      _
    $region15: #{tpu_custom_call.1} parent=1 // pred_check_branch
      %108 = sbr.rel (0) target = $region17
    $region16: #{tpu_custom_call.1} parent=1 // pred_region
      %s110 = ssub.s32 256, 256
      %111 = vsyncadd [#allocation4], %s110
      %s112 = sshll.u32 [#allocation5], 4
      %s113 = int_to_ptr.vmem [resolvable:$true] %s112
      %118 = dma.vmem_to_hbm [thread:$0]  %s113, 256, %s2, [#allocation4], 32, 32, 2
    $region17: #{tpu_custom_call.1} parent=1 // pred_fallthru
      _
    // Predicated region
    $region18: #{tpu_custom_call.1} parent=1 // pred_check
      _
    $region19: #{tpu_custom_call.1} parent=1 // pred_check_branch
      %120 = sbr.rel (0) target = $region21
    $region20: #{tpu_custom_call.1} parent=1 // pred_region
      %121 = dma.done [#allocation4], 256
    $region21: #{tpu_custom_call.1} parent=1 // pred_fallthru
      _
    %122 = vsyncpa [#allocation3], 1
    %123 = vsyncpa [#allocation4], 1

</llo_original>
